<compile_context>
chip_gen: v7x
topology: tpu7x:2x2x1
jax: 0.10.0
libtpu: 0.0.40
codegen_flags: <defaults>
</compile_context>

<pallas_src>
import functools

import jax
import jax.numpy as jnp
from jax.experimental import pallas as pl
from jax.experimental.pallas import tpu as pltpu

_SUBLANE = 8  # vreg sublane height


def _round_up(n, m):
    return ((n + m - 1) // m) * m


def _qnetwork_kernel(x_ref, w1_ref, b1_ref, w2_ref, b2_ref, w3_ref, b3_ref,
                     out_ref):
    # Cast activations to the weight operand dtype (bf16) for native MXU
    # passes; all accumulation / bias-add / ReLU happen in f32.
    x = x_ref[...].astype(w1_ref.dtype)
    # fc1 + ReLU
    h1 = jnp.dot(x, w1_ref[...], preferred_element_type=jnp.float32)
    h1 = jnp.maximum(h1 + b1_ref[...], 0.0)
    # fc2 + ReLU
    h2 = jnp.dot(h1.astype(w2_ref.dtype), w2_ref[...],
                 preferred_element_type=jnp.float32)
    h2 = jnp.maximum(h2 + b2_ref[...], 0.0)
    # fc3 (no activation)
    q = jnp.dot(h2.astype(w3_ref.dtype), w3_ref[...],
                preferred_element_type=jnp.float32)
    out_ref[...] = (q + b3_ref[...]).astype(out_ref.dtype)


def prepare_params(params, *, operand_dtype=jnp.bfloat16):
    """One-time parameter preparation (hoisted out of the forward pass):
    cast weights to bf16 MXU operands, keep biases f32 as (1, N) rows."""
    return {
        "w1": params["w1"].astype(operand_dtype),
        "w2": params["w2"].astype(operand_dtype),
        "w3": params["w3"].astype(operand_dtype),
        "b1": params["b1"].astype(jnp.float32).reshape(1, -1),
        "b2": params["b2"].astype(jnp.float32).reshape(1, -1),
        "b3": params["b3"].astype(jnp.float32).reshape(1, -1),
    }


@functools.partial(jax.jit, static_argnames=("tm_max",))
def qnetwork_forward(x, prepared, *, tm_max=512):
    """x: (batch, state_size) float32.  prepared: output of prepare_params."""
    w1, b1 = prepared["w1"], prepared["b1"]
    w2, b2 = prepared["w2"], prepared["b2"]
    w3, b3 = prepared["w3"], prepared["b3"]

    batch, state_size = x.shape
    hidden = w1.shape[1]
    action_size = w3.shape[1]

    # Batch tiling: only the batch dim is padded; every feature dim stays at
    # its natural width (full-extent blocks).  tm is forced to a multiple of 8
    # and, when possible, the batch is split into >= 2 tiles so both v7x
    # TensorCores get work via the "parallel" grid axis.
    tm_cap = max(_SUBLANE, _round_up(tm_max, _SUBLANE))
    b8 = _round_up(batch, _SUBLANE)
    half = _round_up(-(-b8 // 2), _SUBLANE)        # ceil(b8/2), sublane-aligned
    tm = min(tm_cap, max(_SUBLANE, half))
    bp = _round_up(b8, tm)

    xp = x if bp == batch else jnp.pad(x, ((0, bp - batch), (0, 0)))

    # Weights/biases: full-array blocks with a constant index map so they are
    # fetched once and stay resident in VMEM across all batch tiles.
    const_spec = lambda a: pl.BlockSpec(a.shape, lambda i: (0, 0))

    flops = 2 * bp * (state_size * hidden + hidden * hidden
                      + hidden * action_size)
    bytes_accessed = (
        xp.size * xp.dtype.itemsize
        + sum(a.size * a.dtype.itemsize for a in (w1, b1, w2, b2, w3, b3))
        + bp * action_size * 4)

    out = pl.pallas_call(
        _qnetwork_kernel,
        out_shape=jax.ShapeDtypeStruct((bp, action_size), jnp.float32),
        grid=(bp // tm,),
        in_specs=[
            pl.BlockSpec((tm, state_size), lambda i: (i, 0)),  # per-tile x
            const_spec(w1), const_spec(b1),
            const_spec(w2), const_spec(b2),
            const_spec(w3), const_spec(b3),
        ],
        out_specs=pl.BlockSpec((tm, action_size), lambda i: (i, 0)),
        compiler_params=pltpu.CompilerParams(
            dimension_semantics=("parallel",)),
        cost_estimate=pl.CostEstimate(flops=flops, transcendentals=0,
                                      bytes_accessed=bytes_accessed),
    )(xp, w1, b1, w2, b2, w3, b3)

    # Strip batch padding (feature dims were never padded).
    return out if bp == batch else out[:batch]


def init_qnetwork_params(key, state_size, action_size, hidden=148):
    """Deterministic init mimicking PyTorch nn.Linear default:
    U(-1/sqrt(fan_in), 1/sqrt(fan_in)) for both weight and bias."""
    def linear(key, fan_in, fan_out):
        kw, kb = jax.random.split(key)
        bound = 1.0 / jnp.sqrt(jnp.float32(fan_in))
        w = jax.random.uniform(kw, (fan_in, fan_out), jnp.float32,
                               minval=-bound, maxval=bound)
        b = jax.random.uniform(kb, (fan_out,), jnp.float32,
                               minval=-bound, maxval=bound)
        return w, b

    k1, k2, k3 = jax.random.split(key, 3)
    w1, b1 = linear(k1, state_size, hidden)
    w2, b2 = linear(k2, hidden, hidden)
    w3, b3 = linear(k3, hidden, action_size)
    return {"w1": w1, "b1": b1, "w2": w2, "b2": b2, "w3": w3, "b3": b3}


def _reference(x, params):
    h1 = jnp.maximum(x @ params["w1"] + params["b1"], 0.0)
    h2 = jnp.maximum(h1 @ params["w2"] + params["b2"], 0.0)
    return h2 @ params["w3"] + params["b3"]


if __name__ == "__main__":
    key = jax.random.PRNGKey(0)
    k_params, k_x1, k_x2 = jax.random.split(key, 3)

    state_size, action_size = 16, 4
    raw_params = init_qnetwork_params(k_params, state_size, action_size)
    params = prepare_params(raw_params)  # one-time prep, outside the forward

    # Small batch (single grid step).
    batch = 8
    x = jax.random.normal(k_x1, (batch, state_size), jnp.float32)
    q = qnetwork_forward(x, params)
    jax.block_until_ready(q)
    q_ref = _reference(x, raw_params)
    assert q.shape == (batch, action_size)
    # bf16 operands (f32 accumulation) vs f32 reference -> loose tolerance.
    assert jnp.allclose(q, q_ref, atol=3e-2, rtol=3e-2)

    # Ragged batch exercising multiple batch tiles + batch padding + small tm.
    batch2 = 40
    x2 = jax.random.normal(k_x2, (batch2, state_size), jnp.float32)
    q2 = qnetwork_forward(x2, params, tm_max=16)
    jax.block_until_ready(q2)
    q2_ref = _reference(x2, raw_params)
    assert q2.shape == (batch2, action_size)
    assert jnp.allclose(q2, q2_ref, atol=3e-2, rtol=3e-2)

    print("KERNEL_OK")
</pallas_src>

<mosaic_0001>
module attributes {stable_mosaic.version = 11 : i64} {
  func.func @_qnetwork_kernel(%arg0: i32, %arg1: memref<8x16xf32, #tpu.memory_space<vmem>>, %arg2: memref<16x148xbf16, #tpu.memory_space<vmem>>, %arg3: memref<1x148xf32, #tpu.memory_space<vmem>>, %arg4: memref<148x148xbf16, #tpu.memory_space<vmem>>, %arg5: memref<1x148xf32, #tpu.memory_space<vmem>>, %arg6: memref<148x4xbf16, #tpu.memory_space<vmem>>, %arg7: memref<1x4xf32, #tpu.memory_space<vmem>>, %arg8: memref<8x4xf32, #tpu.memory_space<vmem>>) attributes {dimension_semantics = [#tpu.dimension_semantics<parallel>], iteration_bounds = array<i64: 1>, scalar_prefetch = 0 : i64, scratch_operands = 0 : i64, tpu.core_type = #tpu.core_type<tc>, window_params = [{transform_indices = @transform_0, window_bounds = array<i64: 8, 16>}, {pipeline_mode = #tpu.pipeline_mode<synchronous>, transform_indices = @transform_1, window_bounds = array<i64: 16, 148>}, {pipeline_mode = #tpu.pipeline_mode<synchronous>, transform_indices = @transform_2, window_bounds = array<i64: 1, 148>}, {pipeline_mode = #tpu.pipeline_mode<synchronous>, transform_indices = @transform_3, window_bounds = array<i64: 148, 148>}, {pipeline_mode = #tpu.pipeline_mode<synchronous>, transform_indices = @transform_4, window_bounds = array<i64: 1, 148>}, {pipeline_mode = #tpu.pipeline_mode<synchronous>, transform_indices = @transform_5, window_bounds = array<i64: 148, 4>}, {pipeline_mode = #tpu.pipeline_mode<synchronous>, transform_indices = @transform_6, window_bounds = array<i64: 1, 4>}, {transform_indices = @transform_7, window_bounds = array<i64: 8, 4>}]} {
    %c0 = arith.constant 0 : index
    %c0_0 = arith.constant 0 : index
    %0 = vector.load %arg1[%c0, %c0_0] : memref<8x16xf32, #tpu.memory_space<vmem>>, vector<8x16xf32>
    %1 = arith.truncf %0 : vector<8x16xf32> to vector<8x16xbf16>
    %c0_1 = arith.constant 0 : index
    %c0_2 = arith.constant 0 : index
    %2 = vector.load %arg2[%c0_1, %c0_2] : memref<16x148xbf16, #tpu.memory_space<vmem>>, vector<16x148xbf16>
    %cst = arith.constant dense<0.000000e+00> : vector<8x148xf32>
    %3 = tpu.matmul %1, %2, %cst {dimension_numbers = #tpu.dot_dimension_numbers<[1], [0], [0], [1], [0, 0, 1, 1], [], []>} : vector<8x16xbf16>, vector<16x148xbf16>, vector<8x148xf32> -> vector<8x148xf32>
    %c0_3 = arith.constant 0 : index
    %c0_4 = arith.constant 0 : index
    %4 = vector.load %arg3[%c0_3, %c0_4] : memref<1x148xf32, #tpu.memory_space<vmem>>, vector<1x148xf32>
    %5 = vector.broadcast %4 : vector<1x148xf32> to vector<8x148xf32>
    %6 = arith.addf %3, %5 : vector<8x148xf32>
    %cst_5 = arith.constant 0.000000e+00 : f32
    %7 = vector.broadcast %cst_5 : f32 to vector<8x148xf32>
    %8 = arith.maximumf %6, %7 : vector<8x148xf32>
    %9 = arith.truncf %8 : vector<8x148xf32> to vector<8x148xbf16>
    %c0_6 = arith.constant 0 : index
    %c0_7 = arith.constant 0 : index
    %10 = vector.load %arg4[%c0_6, %c0_7] : memref<148x148xbf16, #tpu.memory_space<vmem>>, vector<148x148xbf16>
    %cst_8 = arith.constant dense<0.000000e+00> : vector<8x148xf32>
    %11 = tpu.matmul %9, %10, %cst_8 {dimension_numbers = #tpu.dot_dimension_numbers<[1], [0], [0], [1], [0, 0, 1, 1], [], []>} : vector<8x148xbf16>, vector<148x148xbf16>, vector<8x148xf32> -> vector<8x148xf32>
    %c0_9 = arith.constant 0 : index
    %c0_10 = arith.constant 0 : index
    %12 = vector.load %arg5[%c0_9, %c0_10] : memref<1x148xf32, #tpu.memory_space<vmem>>, vector<1x148xf32>
    %13 = vector.broadcast %12 : vector<1x148xf32> to vector<8x148xf32>
    %14 = arith.addf %11, %13 : vector<8x148xf32>
    %cst_11 = arith.constant 0.000000e+00 : f32
    %15 = vector.broadcast %cst_11 : f32 to vector<8x148xf32>
    %16 = arith.maximumf %14, %15 : vector<8x148xf32>
    %17 = arith.truncf %16 : vector<8x148xf32> to vector<8x148xbf16>
    %c0_12 = arith.constant 0 : index
    %c0_13 = arith.constant 0 : index
    %18 = vector.load %arg6[%c0_12, %c0_13] : memref<148x4xbf16, #tpu.memory_space<vmem>>, vector<148x4xbf16>
    %cst_14 = arith.constant dense<0.000000e+00> : vector<8x4xf32>
    %19 = tpu.matmul %17, %18, %cst_14 {dimension_numbers = #tpu.dot_dimension_numbers<[1], [0], [0], [1], [0, 0, 1, 1], [], []>} : vector<8x148xbf16>, vector<148x4xbf16>, vector<8x4xf32> -> vector<8x4xf32>
    %c0_15 = arith.constant 0 : index
    %c0_16 = arith.constant 0 : index
    %20 = vector.load %arg7[%c0_15, %c0_16] : memref<1x4xf32, #tpu.memory_space<vmem>>, vector<1x4xf32>
    %21 = vector.broadcast %20 : vector<1x4xf32> to vector<8x4xf32>
    %22 = arith.addf %19, %21 : vector<8x4xf32>
    %c0_17 = arith.constant 0 : index
    %c0_18 = arith.constant 0 : index
    %23 = vector.load %arg8[%c0_17, %c0_18] : memref<8x4xf32, #tpu.memory_space<vmem>>, vector<8x4xf32>
    tpu.vector_store %arg8[%c0_17, %c0_18], %22 {strides = array<i32>} : memref<8x4xf32, #tpu.memory_space<vmem>>, vector<8x4xf32>,
    return
  }
  func.func @transform_0(%arg0: i32) -> (i32, i32) {
    %c0_i32 = arith.constant 0 : i32
    %c0_i32_0 = arith.constant 0 : i32
    return %arg0, %c0_i32 : i32, i32
  }
  func.func @transform_1(%arg0: i32) -> (i32, i32) {
    %c0_i32 = arith.constant 0 : i32
    %c0_i32_0 = arith.constant 0 : i32
    %c0_i32_1 = arith.constant 0 : i32
    return %c0_i32, %c0_i32_0 : i32, i32
  }
  func.func @transform_2(%arg0: i32) -> (i32, i32) {
    %c0_i32 = arith.constant 0 : i32
    %c0_i32_0 = arith.constant 0 : i32
    %c0_i32_1 = arith.constant 0 : i32
    return %c0_i32, %c0_i32_0 : i32, i32
  }
  func.func @transform_3(%arg0: i32) -> (i32, i32) {
    %c0_i32 = arith.constant 0 : i32
    %c0_i32_0 = arith.constant 0 : i32
    %c0_i32_1 = arith.constant 0 : i32
    return %c0_i32, %c0_i32_0 : i32, i32
  }
  func.func @transform_4(%arg0: i32) -> (i32, i32) {
    %c0_i32 = arith.constant 0 : i32
    %c0_i32_0 = arith.constant 0 : i32
    %c0_i32_1 = arith.constant 0 : i32
    return %c0_i32, %c0_i32_0 : i32, i32
  }
  func.func @transform_5(%arg0: i32) -> (i32, i32) {
    %c0_i32 = arith.constant 0 : i32
    %c0_i32_0 = arith.constant 0 : i32
    %c0_i32_1 = arith.constant 0 : i32
    return %c0_i32, %c0_i32_0 : i32, i32
  }
  func.func @transform_6(%arg0: i32) -> (i32, i32) {
    %c0_i32 = arith.constant 0 : i32
    %c0_i32_0 = arith.constant 0 : i32
    %c0_i32_1 = arith.constant 0 : i32
    return %c0_i32, %c0_i32_0 : i32, i32
  }
  func.func @transform_7(%arg0: i32) -> (i32, i32) {
    %c0_i32 = arith.constant 0 : i32
    %c0_i32_0 = arith.constant 0 : i32
    return %arg0, %c0_i32 : i32, i32
  }
}

</mosaic_0001>

<llo_original>
// kernel: qnetwork_forward.1
$region0: #{qnetwork_forward.1}
  #allocation0 [shape = 'u32[]', space=smem, size = 0x4, offset = 0x4, fixed_abs, tag = 'smem constant byte address 0x4 - core index']
  #allocation1 [shape = 'u32[144,128]{1,0:T(1,128)}', space=vmem, size = 0x12000, scoped, tag = 'internal scratch']
  %s0 = inlined_call_operand.vmem [shape: f32[8,16], index: 0, kind: input, shape index: {}]
  %s1 = inlined_call_operand.vmem [shape: bf16[16,148], index: 1, kind: input, shape index: {}]
  %s2 = inlined_call_operand.vmem [shape: f32[1,148], index: 2, kind: input, shape index: {}]
  %s3 = inlined_call_operand.hbm [shape: bf16[148,148], index: 3, kind: input, shape index: {}]
  %s4 = inlined_call_operand.vmem [shape: f32[1,148], index: 4, kind: input, shape index: {}]
  %s5 = inlined_call_operand.vmem [shape: bf16[148,4], index: 5, kind: input, shape index: {}]
  %s6 = inlined_call_operand.vmem [shape: f32[1,4], index: 6, kind: input, shape index: {}]
  %s7 = inlined_call_operand.vmem [shape: f32[8,4], index: 7, kind: output, shape index: {}]
  %s8 = sld [smem:[#allocation0]]
  $region42: #{qnetwork_forward.1} parent=0
    _
  %s10 = ssub.s32 1, %s8
  %s11 = scalar_select 0, %s10, %s8
  $region1: #{qnetwork_forward.1} parent=0
    #allocation2 [shape = 'u8[77824]{0}', space=vmem, size = 0x13000, scoped, tag = 'input window, operand 3, single buffered']
    #allocation3 [shape = 's32[1]{0}', space=sflag, size = 0x4, scoped, tag = 'scoped memory for qnetwork_forward.1']
    %12 = vsyncpa [#allocation3], 0
    // Predicated region
    $region2: #{qnetwork_forward.1} parent=1 // pred_check
      _
    $region3: #{qnetwork_forward.1} parent=1 // pred_check_branch
      %14 = sbr.rel (0) target = $region5
    $region4: #{qnetwork_forward.1} parent=1 // pred_region
      _
    $region5: #{qnetwork_forward.1} parent=1 // pred_fallthru
      _
    // Predicated region
    $region6: #{qnetwork_forward.1} parent=1 // pred_check
      _
    $region7: #{qnetwork_forward.1} parent=1 // pred_check_branch
      %16 = sbr.rel (0) target = $region9
    $region8: #{qnetwork_forward.1} parent=1 // pred_region
      _
    $region9: #{qnetwork_forward.1} parent=1 // pred_fallthru
      _
    // Predicated region
    $region10: #{qnetwork_forward.1} parent=1 // pred_check
      _
    $region11: #{qnetwork_forward.1} parent=1 // pred_check_branch
      %18 = sbr.rel (0) target = $region13
    $region12: #{qnetwork_forward.1} parent=1 // pred_region
      _
    $region13: #{qnetwork_forward.1} parent=1 // pred_fallthru
      _
    // Predicated region
    $region14: #{qnetwork_forward.1} parent=1 // pred_check
      _
    $region15: #{qnetwork_forward.1} parent=1 // pred_check_branch
      %20 = sbr.rel (0) target = $region17
    $region16: #{qnetwork_forward.1} parent=1 // pred_region
      %s22 = ssub.s32 2432, 2432
      %23 = vsyncadd [#allocation3], %s22
      %s24 = sshll.u32 [#allocation2], 4
      %s25 = int_to_ptr.vmem [resolvable:$true] %s24
      %30 = dma.hbm_to_vmem [thread:$0]  %s3, 2432, %s25, [#allocation3], 128, 128, 8
    $region17: #{qnetwork_forward.1} parent=1 // pred_fallthru
      _
    // Predicated region
    $region18: #{qnetwork_forward.1} parent=1 // pred_check
      _
    $region19: #{qnetwork_forward.1} parent=1 // pred_check_branch
      %32 = sbr.rel (0) target = $region21
    $region20: #{qnetwork_forward.1} parent=1 // pred_region
      _
    $region21: #{qnetwork_forward.1} parent=1 // pred_fallthru
      _
    // Predicated region
    $region22: #{qnetwork_forward.1} parent=1 // pred_check
      _
    $region23: #{qnetwork_forward.1} parent=1 // pred_check_branch
      %34 = sbr.rel (0) target = $region25
    $region24: #{qnetwork_forward.1} parent=1 // pred_region
      _
    $region25: #{qnetwork_forward.1} parent=1 // pred_fallthru
      _
    // Predicated region
    $region26: #{qnetwork_forward.1} parent=1 // pred_check
      _
    $region27: #{qnetwork_forward.1} parent=1 // pred_check_branch
      %36 = sbr.rel (0) target = $region29
    $region28: #{qnetwork_forward.1} parent=1 // pred_region
      _
    $region29: #{qnetwork_forward.1} parent=1 // pred_fallthru
      _
    // Predicated region
    $region30: #{qnetwork_forward.1} parent=1 // pred_check
      _
    $region31: #{qnetwork_forward.1} parent=1 // pred_check_branch
      %38 = sbr.rel (0) target = $region33
    $region32: #{qnetwork_forward.1} parent=1 // pred_region
      %39 = dma.done [#allocation3], 2432
    $region33: #{qnetwork_forward.1} parent=1 // pred_fallthru
      _
    %v41 = vld [vmem:[%s0] sm:$0xff]
    %v42 = vpack.c.bf16 %v41, %v41
    %v43 = vld [vmem:[%s1] sm:$0xff]
    %v44 = vld [vmem:[%s1 + $0x8] sm:$0xff]
    %v45 = vld [vmem:[%s2] sm:$0x3]
    %v47 = vlaneseq
    %v48 = vshrl.u32 %v47, 7
    %v49 = vsub.s32 0, %v48
    %v50 = vrot.slane %v45, %v49
    %v51 = vlaneseq
    %v52 = vshrl.u32 %v51, 7
    %v53 = vsub.s32 1, %v52
    %v54 = vrot.slane %v45, %v53
    %v59 = vunpack.c.l.b16 %v43
    %v60 = vunpack.c.h.b16 %v43
    %v61 = vunpack.c.l.b16 %v44
    %v62 = vunpack.c.h.b16 %v44
    %v63 = vpack.c.b16 %v61, %v59
    %v64 = vpack.c.b16 %v62, %v60
    %vm67 = vcmask 130048
    %v69 = vsel %vm67, %v42, 0
    %71 = vmatprep.subr.bf16.mxu0 %v64
    %72 = vmatpush1.bf16.msra.mxu0 %v63
    %73 = vmatprep.subr.bf16.mxu0 0
    %74 = vmatpush1.bf16.msra.mxu0 0
    %75 = vmatprep.subr.bf16.mxu0 0
    %76 = vmatpush1.bf16.msra.mxu0 0
    %77 = vmatprep.subr.bf16.mxu0 0
    %78 = vmatpush1.bf16.msra.mxu0 0
    %79 = vmatprep.subr.bf16.mxu0 0
    %80 = vmatpush1.bf16.msra.mxu0 0
    %81 = vmatprep.subr.bf16.mxu0 0
    %82 = vmatpush1.bf16.msra.mxu0 0
    %83 = vmatprep.subr.bf16.mxu0 0
    %84 = vmatpush1.bf16.msra.mxu0 0
    %85 = vmatprep.subr.bf16.mxu0 0
    %86 = vmatpush1.bf16.msra.mxu0 0
    %87 = vmatprep.subr.bf16.mxu0 0
    %88 = vmatpush1.bf16.msra.mxu0 0
    %89 = vmatprep.subr.bf16.mxu0 0
    %90 = vmatpush1.bf16.msra.mxu0 0
    %91 = vmatprep.subr.bf16.mxu0 0
    %92 = vmatpush1.bf16.msra.mxu0 0
    %93 = vmatprep.subr.bf16.mxu0 0
    %94 = vmatpush1.bf16.msra.mxu0 0
    %95 = vmatprep.subr.bf16.mxu0 0
    %96 = vmatpush1.bf16.msra.mxu0 0
    %97 = vmatprep.subr.bf16.mxu0 0
    %98 = vmatpush1.bf16.msra.mxu0 0
    %99 = vmatprep.subr.bf16.mxu0 0
    %100 = vmatpush1.bf16.msra.mxu0 0
    %101 = vmatprep.subr.bf16.mxu0 0
    %102 = vmatpush1.bf16.msra.mxu0 0
    %103 = vmatprep.mubr.bf16.mxu0 0
    %104 = vmatmul.mubr.bf16.gmra.mrb[0].mxu0 %v69
    %v105 = vpop.f32.mrb[0].mxu0
    %v106 = vadd.f32 %v50, %v105
    %v107 = vpop.f32.mrb[0].mxu0
    %v108 = vadd.f32 %v54, %v107
    %v109 = vpop.f32.mrb[0].mxu0
    %v110 = vpop.f32.mrb[0].mxu0
    %111 = vdwg.mxu0
    %v112 = vmax.f32 %v106, 0.0
    %v113 = vmax.f32 %v108, 0.0
    %v114 = vpack.c.bf16 %v112, %v112
    %v115 = vpack.c.bf16 %v113, %v113
    %v116 = vld [vmem:[#allocation2] sm:$0xff]
    %v117 = vld [vmem:[#allocation2 + $0x8] sm:$0xff]
    %v118 = vld [vmem:[#allocation2 + $0x10] sm:$0xff]
    %v119 = vld [vmem:[#allocation2 + $0x18] sm:$0xff]
    %v120 = vld [vmem:[#allocation2 + $0x20] sm:$0xff]
    %v121 = vld [vmem:[#allocation2 + $0x28] sm:$0xff]
    %v122 = vld [vmem:[#allocation2 + $0x30] sm:$0xff]
    %v123 = vld [vmem:[#allocation2 + $0x38] sm:$0xff]
    %v124 = vld [vmem:[#allocation2 + $0x40] sm:$0xff]
    %v125 = vld [vmem:[#allocation2 + $0x48] sm:$0xff]
    %v126 = vld [vmem:[#allocation2 + $0x50] sm:$0xff]
    %v127 = vld [vmem:[#allocation2 + $0x58] sm:$0xff]
    %v128 = vld [vmem:[#allocation2 + $0x60] sm:$0xff]
    %v129 = vld [vmem:[#allocation2 + $0x68] sm:$0xff]
    %v130 = vld [vmem:[#allocation2 + $0x70] sm:$0xff]
    %v131 = vld [vmem:[#allocation2 + $0x78] sm:$0xff]
    %v132 = vld [vmem:[#allocation2 + $0x80] sm:$0xff]
    %v133 = vld [vmem:[#allocation2 + $0x88] sm:$0xff]
    %v134 = vld [vmem:[#allocation2 + $0x90] sm:$0x33]
    %v135 = vld [vmem:[%s4] sm:$0x3]
    %v137 = vlaneseq
    %v138 = vshrl.u32 %v137, 7
    %v139 = vsub.s32 0, %v138
    %v140 = vrot.slane %v135, %v139
    %v141 = vlaneseq
    %v142 = vshrl.u32 %v141, 7
    %v143 = vsub.s32 1, %v142
    %v144 = vrot.slane %v135, %v143
    %v166 = vunpack.c.l.b16 %v116
    %v167 = vunpack.c.h.b16 %v116
    %v168 = vunpack.c.l.b16 %v117
    %v169 = vunpack.c.h.b16 %v117
    %v170 = vunpack.c.l.b16 %v118
    %v171 = vunpack.c.h.b16 %v118
    %v172 = vunpack.c.l.b16 %v119
    %v173 = vunpack.c.h.b16 %v119
    %v174 = vunpack.c.l.b16 %v120
    %v175 = vunpack.c.h.b16 %v120
    %v176 = vunpack.c.l.b16 %v121
    %v177 = vunpack.c.h.b16 %v121
    %v178 = vunpack.c.l.b16 %v122
    %v179 = vunpack.c.h.b16 %v122
    %v180 = vunpack.c.l.b16 %v123
    %v181 = vunpack.c.h.b16 %v123
    %v182 = vunpack.c.l.b16 %v124
    %v183 = vunpack.c.h.b16 %v124
    %v184 = vunpack.c.l.b16 %v125
    %v185 = vunpack.c.h.b16 %v125
    %v186 = vunpack.c.l.b16 %v126
    %v187 = vunpack.c.h.b16 %v126
    %v188 = vunpack.c.l.b16 %v127
    %v189 = vunpack.c.h.b16 %v127
    %v190 = vunpack.c.l.b16 %v128
    %v191 = vunpack.c.h.b16 %v128
    %v192 = vunpack.c.l.b16 %v129
    %v193 = vunpack.c.h.b16 %v129
    %v194 = vunpack.c.l.b16 %v130
    %v195 = vunpack.c.h.b16 %v130
    %v196 = vunpack.c.l.b16 %v131
    %v197 = vunpack.c.h.b16 %v131
    %v198 = vunpack.c.l.b16 %v132
    %v199 = vunpack.c.h.b16 %v132
    %v200 = vunpack.c.l.b16 %v133
    %v201 = vunpack.c.h.b16 %v133
    %v202 = vunpack.c.l.b16 %v134
    %v203 = vunpack.c.h.b16 %v134
    %v204 = vpack.c.b16 %v168, %v166
    %v205 = vpack.c.b16 %v169, %v167
    %v206 = vpack.c.b16 %v172, %v170
    %v207 = vpack.c.b16 %v173, %v171
    %v208 = vpack.c.b16 %v176, %v174
    %v209 = vpack.c.b16 %v177, %v175
    %v210 = vpack.c.b16 %v180, %v178
    %v211 = vpack.c.b16 %v181, %v179
    %v212 = vpack.c.b16 %v184, %v182
    %v213 = vpack.c.b16 %v185, %v183
    %v214 = vpack.c.b16 %v188, %v186
    %v215 = vpack.c.b16 %v189, %v187
    %v216 = vpack.c.b16 %v192, %v190
    %v217 = vpack.c.b16 %v193, %v191
    %v218 = vpack.c.b16 %v196, %v194
    %v219 = vpack.c.b16 %v197, %v195
    %v220 = vpack.c.b16 %v200, %v198
    %v221 = vpack.c.b16 %v201, %v199
    %v222 = vpack.c.b16 %v202, %v202
    %v223 = vpack.c.b16 %v203, %v203
    %vm242 = vcmask 162816
    %v244 = vsel %vm242, %v115, 0
    %vm246 = vcmask 1041408
    %v248 = vsel %vm246, %v222, 0
    %v251 = vsel %vm246, %v223, 0
    %253 = vmatprep.subr.bf16.mxu0 %v205
    %254 = vmatpush1.bf16.msra.mxu0 %v204
    %255 = vmatprep.subr.bf16.mxu0 %v207
    %256 = vmatpush1.bf16.msra.mxu0 %v206
    %257 = vmatprep.subr.bf16.mxu0 %v209
    %258 = vmatpush1.bf16.msra.mxu0 %v208
    %259 = vmatprep.subr.bf16.mxu0 %v211
    %260 = vmatpush1.bf16.msra.mxu0 %v210
    %261 = vmatprep.subr.bf16.mxu0 %v213
    %262 = vmatpush1.bf16.msra.mxu0 %v212
    %263 = vmatprep.subr.bf16.mxu0 %v215
    %264 = vmatpush1.bf16.msra.mxu0 %v214
    %265 = vmatprep.subr.bf16.mxu0 %v217
    %266 = vmatpush1.bf16.msra.mxu0 %v216
    %267 = vmatprep.subr.bf16.mxu0 %v219
    %268 = vmatpush1.bf16.msra.mxu0 %v218
    %269 = vmatprep.subr.bf16.mxu0 %v221
    %270 = vmatpush1.bf16.msra.mxu0 %v220
    %271 = vmatprep.subr.bf16.mxu0 %v251
    %272 = vmatpush1.bf16.msra.mxu0 %v248
    %273 = vmatprep.subr.bf16.mxu0 0
    %274 = vmatpush1.bf16.msra.mxu0 0
    %275 = vmatprep.subr.bf16.mxu0 0
    %276 = vmatpush1.bf16.msra.mxu0 0
    %277 = vmatprep.subr.bf16.mxu0 0
    %278 = vmatpush1.bf16.msra.mxu0 0
    %279 = vmatprep.subr.bf16.mxu0 0
    %280 = vmatpush1.bf16.msra.mxu0 0
    %281 = vmatprep.subr.bf16.mxu0 0
    %282 = vmatpush1.bf16.msra.mxu0 0
    %283 = vmatprep.subr.bf16.mxu0 0
    %284 = vmatpush1.bf16.msra.mxu0 0
    %285 = vmatprep.mubr.bf16.mxu0 %v244
    %286 = vmatmul.mubr.bf16.gmra.mrb[0].mxu0 %v114
    %v287 = vpop.f32.mrb[0].mxu0
    %v288 = vadd.f32 %v140, %v287
    %v289 = vpop.f32.mrb[0].mxu0
    %v290 = vadd.f32 %v144, %v289
    %v291 = vpop.f32.mrb[0].mxu0
    %v292 = vpop.f32.mrb[0].mxu0
    %293 = vdwg.mxu0
    %v294 = vmax.f32 %v288, 0.0
    %v295 = vmax.f32 %v290, 0.0
    %v296 = vpack.c.bf16 %v294, %v294
    %v297 = vpack.c.bf16 %v295, %v295
    %v298 = vld [vmem:[%s5] sm:$0xf]
    %v299 = vld [vmem:[%s5 + $0x4] sm:$0xf]
    %v300 = vld [vmem:[%s5 + $0x8] sm:$0xf]
    %v301 = vld [vmem:[%s5 + $0xc] sm:$0xf]
    %v302 = vld [vmem:[%s5 + $0x10] sm:$0xf]
    %v303 = vld [vmem:[%s5 + $0x14] sm:$0xf]
    %v304 = vld [vmem:[%s5 + $0x18] sm:$0xf]
    %v305 = vld [vmem:[%s5 + $0x1c] sm:$0xf]
    %v306 = vld [vmem:[%s5 + $0x20] sm:$0xf]
    %v307 = vld [vmem:[%s5 + $0x24] sm:$0xf]
    %v308 = vld [vmem:[%s5 + $0x28] sm:$0xf]
    %v309 = vld [vmem:[%s5 + $0x2c] sm:$0xf]
    %v310 = vld [vmem:[%s5 + $0x30] sm:$0xf]
    %v311 = vld [vmem:[%s5 + $0x34] sm:$0xf]
    %v312 = vld [vmem:[%s5 + $0x38] sm:$0xf]
    %v313 = vld [vmem:[%s5 + $0x3c] sm:$0xf]
    %v314 = vld [vmem:[%s5 + $0x40] sm:$0xf]
    %v315 = vld [vmem:[%s5 + $0x44] sm:$0xf]
    %v316 = vld [vmem:[%s5 + $0x48] sm:$0x3]
    %v317 = vld [vmem:[%s6] sm:$0x1]
    %v319 = vlaneseq
    %v320 = vshrl.u32 %v319, 7
    %v321 = vsub.s32 0, %v320
    %v322 = vrot.slane %v317, %v321
    %v343 = vunpack.c.l.b16 %v298
    %v344 = vunpack.c.l.b16 %v299
    %v345 = vunpack.c.l.b16 %v300
    %v346 = vunpack.c.l.b16 %v301
    %v347 = vunpack.c.l.b16 %v302
    %v348 = vunpack.c.l.b16 %v303
    %v349 = vunpack.c.l.b16 %v304
    %v350 = vunpack.c.l.b16 %v305
    %v351 = vunpack.c.l.b16 %v306
    %v352 = vunpack.c.l.b16 %v307
    %v353 = vunpack.c.l.b16 %v308
    %v354 = vunpack.c.l.b16 %v309
    %v355 = vunpack.c.l.b16 %v310
    %v356 = vunpack.c.l.b16 %v311
    %v357 = vunpack.c.l.b16 %v312
    %v358 = vunpack.c.l.b16 %v313
    %v359 = vunpack.c.l.b16 %v314
    %v360 = vunpack.c.l.b16 %v315
    %v361 = vunpack.c.l.b16 %v316
    %v362 = vpack.c.b16 %v344, %v343
    %v363 = vpack.c.b16 %v346, %v345
    %v364 = vpack.c.b16 %v348, %v347
    %v365 = vpack.c.b16 %v350, %v349
    %v366 = vpack.c.b16 %v352, %v351
    %v367 = vpack.c.b16 %v354, %v353
    %v368 = vpack.c.b16 %v356, %v355
    %v369 = vpack.c.b16 %v358, %v357
    %v370 = vpack.c.b16 %v360, %v359
    %v371 = vpack.c.b16 %v361, %v361
    %v382 = vsel %vm242, %v297, 0
    %v385 = vsel %vm246, %v371, 0
    %387 = vmatprep.subr.bf16.mxu0 0
    %388 = vmatpush1.bf16.msra.mxu0 %v362
    %389 = vmatprep.subr.bf16.mxu0 0
    %390 = vmatpush1.bf16.msra.mxu0 %v363
    %391 = vmatprep.subr.bf16.mxu0 0
    %392 = vmatpush1.bf16.msra.mxu0 %v364
    %393 = vmatprep.subr.bf16.mxu0 0
    %394 = vmatpush1.bf16.msra.mxu0 %v365
    %395 = vmatprep.subr.bf16.mxu0 0
    %396 = vmatpush1.bf16.msra.mxu0 %v366
    %397 = vmatprep.subr.bf16.mxu0 0
    %398 = vmatpush1.bf16.msra.mxu0 %v367
    %399 = vmatprep.subr.bf16.mxu0 0
    %400 = vmatpush1.bf16.msra.mxu0 %v368
    %401 = vmatprep.subr.bf16.mxu0 0
    %402 = vmatpush1.bf16.msra.mxu0 %v369
    %403 = vmatprep.subr.bf16.mxu0 0
    %404 = vmatpush1.bf16.msra.mxu0 %v370
    %405 = vmatprep.subr.bf16.mxu0 0
    %406 = vmatpush1.bf16.msra.mxu0 %v385
    %407 = vmatprep.subr.bf16.mxu0 0
    %408 = vmatpush1.bf16.msra.mxu0 0
    %409 = vmatprep.subr.bf16.mxu0 0
    %410 = vmatpush1.bf16.msra.mxu0 0
    %411 = vmatprep.subr.bf16.mxu0 0
    %412 = vmatpush1.bf16.msra.mxu0 0
    %413 = vmatprep.subr.bf16.mxu0 0
    %414 = vmatpush1.bf16.msra.mxu0 0
    %415 = vmatprep.subr.bf16.mxu0 0
    %416 = vmatpush1.bf16.msra.mxu0 0
    %417 = vmatprep.subr.bf16.mxu0 0
    %418 = vmatpush1.bf16.msra.mxu0 0
    %419 = vmatprep.mubr.bf16.mxu0 %v382
    %420 = vmatmul.mubr.bf16.gmra.mrb[0].mxu0 %v296
    %v421 = vpop.f32.mrb[0].mxu0
    %v422 = vadd.f32 %v322, %v421
    %v423 = vpop.f32.mrb[0].mxu0
    %v424 = vpop.f32.mrb[0].mxu0
    %v425 = vpop.f32.mrb[0].mxu0
    %426 = vdwg.mxu0
    %vm427 = vcmask 31744
    %428 = vst.msk [vmem:[%s7] sm:$0xff] %vm427, %v422
    // Predicated region
    $region34: #{qnetwork_forward.1} parent=1 // pred_check
      _
    $region35: #{qnetwork_forward.1} parent=1 // pred_check_branch
      %430 = sbr.rel (0) target = $region37
    $region36: #{qnetwork_forward.1} parent=1 // pred_region
      _
    $region37: #{qnetwork_forward.1} parent=1 // pred_fallthru
      _
    // Predicated region
    $region38: #{qnetwork_forward.1} parent=1 // pred_check
      _
    $region39: #{qnetwork_forward.1} parent=1 // pred_check_branch
      %432 = sbr.rel (0) target = $region41
    $region40: #{qnetwork_forward.1} parent=1 // pred_region
      _
    $region41: #{qnetwork_forward.1} parent=1 // pred_fallthru
      _
    %433 = vsyncpa [#allocation3], 1

</llo_original>
